<compile_context>
chip_gen: v6e
topology: v6e:2x2x1
jax: 0.10.0
libtpu: 0.0.40
codegen_flags: <defaults>
</compile_context>

<pallas_src>
import functools

import jax
import jax.numpy as jnp
from jax.experimental import pallas as pl
from jax.experimental.pallas import tpu as pltpu


def _round_up(x, m):
    return (x + m - 1) // m * m


def _vmem_limit_bytes():
    """Generation-aware VMEM limit (~85% of physical, capped at 110 MiB)."""
    cap = 64 * 1024 * 1024          # conservative fallback (safe on every generation)
    try:
        cap = int(pltpu.get_tpu_info().vmem_capacity_bytes)
    except Exception:
        pass
    return min(int(cap * 0.85), 110 * 1024 * 1024)


def _choose_tiles(T, B, H, S, TVp, CVp, vmem_limit, row_tile=None, col_tile=None):
    """VMEM-budget-aware (row tile TT, vocab-column tile TN) selection."""

    def vmem_need(tt, tn):
        nj = TVp // tn
        wbuf = 1 if nj == 1 else 2               # invariant weight -> single buffer
        return (2 * tt * H * 2                   # hidden  (bf16, double-buffered)
                + 2 * tt * S * 2                 # attn    (bf16)
                + 2 * S * CVp * 2                # src_map (bf16)
                + wbuf * (H * tn * 2 + tn * 4)   # w / b column tile
                + 2 * (H * 128 * 2 + 128 * 4)    # copy-gate operands (tiny)
                + 2 * tt * tn * 4                # gen-out tile  (f32, double-buffered)
                + 2 * tt * CVp * 4               # copy-out tile (f32)
                + 3 * tt * 128 * 4)              # (TT,1) scratch, lane-padded

    row_cands = [c for c in (256, 128, 64, 32, 16, 8) if c <= T and T % c == 0]
    if not row_cands:
        row_cands = [T]                          # tiny T: full-extent block is legal
    col_cands = sorted({c for c in (TVp, 8192, 4096, 2048, 1024, 512, 256, 128)
                        if c <= TVp and TVp % c == 0}, reverse=True)
    if row_tile is not None:
        row_cands = [row_tile]
    if col_tile is not None:
        col_cands = [col_tile]

    limit = int(vmem_limit * 0.7)                # headroom for Mosaic internal scratch

    def pick():
        # Prefer wide vocab tiles (amortizes per-step overhead and the second
        # softmax pass), then the largest row tile that still fits.
        for min_tn in (min(TVp, 2048), min(TVp, 512), 128):
            for tt in row_cands:
                for tn in col_cands:
                    if tn >= min_tn and vmem_need(tt, tn) <= limit:
                        return tt, tn
        return row_cands[-1], col_cands[-1]

    tt, tn = pick()

    # v7x has 2 TensorCores: keep at least 2 tiles in the parallel grid axes.
    while (B * (T // tt) < 2 and tt % 2 == 0 and (tt // 2) % 8 == 0
           and T % (tt // 2) == 0):
        tt //= 2
    return tt, tn


def copy_generator_kernel(hidden_ref, attn_ref, src_map_ref, w_ref, b_ref,
                          wc_ref, bc_ref, gen_ref, copy_ref,
                          p_sc, m_sc, l_sc, *, nj):
    f32 = jnp.float32
    hidden = hidden_ref[0]                                    # (TT, H) bf16

    def copy_gate():
        # p(copy): only column 0 of wc/bc is nonzero (guaranteed by construction in
        # the wrapper), so a lane-group sum recovers  hidden @ w_copy + b_copy
        # without a mid-lane single-column extract.
        cl = jnp.sum(jnp.dot(hidden, wc_ref[...], preferred_element_type=f32)
                     + bc_ref[...], axis=-1, keepdims=True)   # (TT, 1)
        return jax.nn.sigmoid(cl)

    def copy_dist(p):
        # Copy distribution: the row-scalar gate commutes through the matmul, so it
        # scales the f32 *output* -- the MXU never waits on the sigmoid.
        cp = jnp.dot(attn_ref[0], src_map_ref[0], preferred_element_type=f32)
        copy_ref[0] = (p * cp).astype(copy_ref.dtype)

    # Target-vocab logits for this column tile (bias carries pad-token / lane-pad -inf).
    logits = jnp.dot(hidden, w_ref[...], preferred_element_type=f32) + b_ref[...]

    if nj == 1:
        # Whole padded vocab in one tile: fused single-pass softmax + gate.
        p = copy_gate()
        copy_dist(p)
        m = jnp.max(logits, axis=-1, keepdims=True)
        e = jnp.exp(logits - m)                               # padded cols -> exactly 0
        scale = (1.0 - p) * pl.reciprocal(jnp.sum(e, axis=-1, keepdims=True),
                                          approx=True)
        gen_ref[0] = (e * scale).astype(gen_ref.dtype)
        return

    j = pl.program_id(2)                                      # 0 .. 2*nj - 1

    @pl.when(j == 0)
    def _():
        p = copy_gate()
        p_sc[...] = p
        copy_dist(p)
        m_sc[...] = jnp.full(m_sc.shape, -jnp.inf, m_sc.dtype)
        l_sc[...] = jnp.zeros(l_sc.shape, l_sc.dtype)

    @pl.when(j < nj)            # pass 1: running row max / sum over vocab tiles
    def _():
        m_new = jnp.maximum(m_sc[...], jnp.max(logits, axis=-1, keepdims=True))
        l_sc[...] = (l_sc[...] * jnp.exp(m_sc[...] - m_new)
                     + jnp.sum(jnp.exp(logits - m_new), axis=-1, keepdims=True))
        m_sc[...] = m_new

    @pl.when(j >= nj)           # pass 2: normalized, gated probabilities per tile
    def _():
        scale = (1.0 - p_sc[...]) * pl.reciprocal(l_sc[...], approx=True)
        gen_ref[0] = (jnp.exp(logits - m_sc[...]) * scale).astype(gen_ref.dtype)


def copy_generator(hidden, attn, src_map, w_gen, b_gen, w_copy, b_copy, *,
                   pad_idx, tlen, batch, row_tile=None, col_tile=None,
                   out_dtype=jnp.float32, return_batch_major=False):
    N, H = hidden.shape
    N2, S = attn.shape
    S2, B, CV = src_map.shape
    TV = w_gen.shape[1]
    T = tlen
    assert N == N2 == T * batch and S == S2 and B == batch

    f32, bf16 = jnp.float32, jnp.bfloat16
    TVp = _round_up(TV, 128)           # lane-padded target vocab width
    CVp = _round_up(CV, 128)           # lane-padded copy vocab width

    # ---- host-side layout plumbing: batch-major, lane-dense, bf16 MXU operands ----
    hidden_bm = hidden.reshape(T, B, H).transpose(1, 0, 2).astype(bf16)   # (B,T,H)
    attn_bm = attn.reshape(T, B, S).transpose(1, 0, 2).astype(bf16)       # (B,T,S)
    src_map_bm = jnp.transpose(src_map, (1, 0, 2))                        # (B,S,CV)
    if CVp != CV:
        src_map_bm = jnp.pad(src_map_bm, ((0, 0), (0, 0), (0, CVp - CV)))
    src_map_bm = src_map_bm.astype(bf16)

    # generator weights, lane-padded; pad-token and lane-pad masks folded into the bias
    w_pad = jnp.zeros((H, TVp), f32).at[:, :TV].set(w_gen.astype(f32)).astype(bf16)
    b_pad = jnp.zeros((1, TVp), f32).at[:, :TV].set(b_gen.astype(f32))
    b_pad = b_pad.at[:, TV:].set(-jnp.inf).at[:, pad_idx].set(-jnp.inf)

    # copy gate as a dedicated tiny operand pair; only column 0 is nonzero
    wc_pad = jnp.zeros((H, 128), f32).at[:, 0].set(w_copy.astype(f32)[0]).astype(bf16)
    bc_pad = jnp.zeros((1, 128), f32).at[:, 0].set(b_copy.astype(f32)[0, 0])

    vmem_limit = _vmem_limit_bytes()
    TT, TN = _choose_tiles(T, B, H, S, TVp, CVp, vmem_limit,
                           row_tile=row_tile, col_tile=col_tile)
    nj = TVp // TN
    nsteps = 2 * nj if nj > 1 else 1            # two passes over vocab tiles when tiled
    grid = (B, T // TT, nsteps)

    if nj == 1:
        w_idx = lambda b, i, j: (0, 0)
        gen_idx = lambda b, i, j: (b, i, 0)
    else:
        w_idx = lambda b, i, j: (0, j % nj)                      # same walk both passes
        gen_idx = lambda b, i, j: (b, i, jnp.maximum(j - nj, 0))  # written in pass 2 only

    # Single-buffer truly grid-invariant operands (nothing to overlap).
    invariant = dict(pipeline_mode=pl.Buffered(1)) if hasattr(pl, "Buffered") else {}
    w_kwargs = invariant if nj == 1 else {}      # column-tiled weights want 2 buffers

    kernel = functools.partial(copy_generator_kernel, nj=nj)
    gen_p, copy_p = pl.pallas_call(
        kernel,
        out_shape=(jax.ShapeDtypeStruct((B, T, TVp), out_dtype),
                   jax.ShapeDtypeStruct((B, T, CVp), out_dtype)),
        grid_spec=pltpu.PrefetchScalarGridSpec(
            num_scalar_prefetch=0,
            grid=grid,
            in_specs=[
                pl.BlockSpec((1, TT, H), lambda b, i, j: (b, i, 0)),    # hidden
                pl.BlockSpec((1, TT, S), lambda b, i, j: (b, i, 0)),    # attn
                pl.BlockSpec((1, S, CVp), lambda b, i, j: (b, 0, 0)),   # src_map (per-batch)
                pl.BlockSpec((H, TN), w_idx, **w_kwargs),               # W_gen column tile
                pl.BlockSpec((1, TN), w_idx, **w_kwargs),               # bias column tile
                pl.BlockSpec((H, 128), lambda b, i, j: (0, 0), **invariant),  # w_copy
                pl.BlockSpec((1, 128), lambda b, i, j: (0, 0), **invariant),  # b_copy
            ],
            out_specs=(
                pl.BlockSpec((1, TT, TN), gen_idx),                     # gen probs (tiled)
                pl.BlockSpec((1, TT, CVp), lambda b, i, j: (b, i, 0)),  # copy probs
            ),
            scratch_shapes=[pltpu.VMEM((TT, 1), f32)] * 3,              # p_copy, m, l
        ),
        compiler_params=pltpu.CompilerParams(
            dimension_semantics=("parallel", "parallel", "arbitrary"),
            vmem_limit_bytes=vmem_limit,
        ),
    )(hidden_bm, attn_bm, src_map_bm, w_pad, b_pad, wc_pad, bc_pad)

    if return_batch_major:
        # Padded, batch-major outputs with no epilogue relayout (for consumers that
        # can index (b, t, vocab) directly).
        return gen_p, copy_p

    # TODO(synk): writing the module's (t*batch + b)-interleaved rows directly from the
    # kernel would need B-strided sublane stores, which BlockSpec cannot express; the
    # relayout below is a single fused XLA slice+transpose+concat pass instead.
    out = jnp.concatenate([gen_p[:, :, :TV], copy_p[:, :, :CV]], axis=-1)  # (B,T,TV+CV)
    return out.transpose(1, 0, 2).reshape(N, TV + CV)


def reference(hidden, attn, src_map, w_gen, b_gen, w_copy, b_copy, pad_idx, tlen, batch):
    logits = hidden @ w_gen + b_gen
    logits = logits.at[:, pad_idx].set(-jnp.inf)
    prob = jax.nn.softmax(logits, axis=-1)
    copy = jax.nn.sigmoid(hidden @ w_copy.T + b_copy)          # (N, 1)
    out_prob = prob * (1.0 - copy)
    mul_attn = attn * copy
    cp = jnp.einsum("tbs,sbv->tbv", mul_attn.reshape(tlen, batch, -1), src_map)
    cp = cp.reshape(tlen * batch, -1)
    return jnp.concatenate([out_prob, cp], axis=1)


if __name__ == "__main__":
    def run_case(tlen, batch, h, tv, s, cv, pad_idx, **kw):
        key = jax.random.PRNGKey(0)
        k0, k1, k2, k3, k4, k5, k6 = jax.random.split(key, 7)
        n = tlen * batch            # batch_by_tlen (row index = t * batch + b)
        hidden = jax.random.normal(k0, (n, h), jnp.float32)
        attn = jax.nn.softmax(jax.random.normal(k1, (n, s), jnp.float32), axis=-1)
        src_map = jax.random.uniform(k2, (s, batch, cv), jnp.float32)
        w_gen = 0.05 * jax.random.normal(k3, (h, tv), jnp.float32)    # linear.weight.T
        b_gen = 0.05 * jax.random.normal(k4, (1, tv), jnp.float32)    # linear.bias
        w_copy = 0.05 * jax.random.normal(k5, (1, h), jnp.float32)    # linear_copy.weight
        b_copy = 0.05 * jax.random.normal(k6, (1, 1), jnp.float32)    # linear_copy.bias

        out = copy_generator(hidden, attn, src_map, w_gen, b_gen, w_copy, b_copy,
                             pad_idx=pad_idx, tlen=tlen, batch=batch, **kw)
        out = jax.block_until_ready(out)

        ref = reference(hidden, attn, src_map, w_gen, b_gen, w_copy, b_copy,
                        pad_idx, tlen, batch)
        assert out.shape == (n, tv + cv)
        # bf16 MXU operands + approx EUP reciprocal vs an all-f32 reference -> loose tol.
        assert jnp.allclose(out, ref, rtol=2e-2, atol=2e-3), "mismatch vs JAX reference"

    # Path 1: whole padded vocab in one column tile (nj == 1, fused single-pass softmax).
    run_case(tlen=4, batch=2, h=128, tv=256, s=128, cv=128, pad_idx=1)
    # Path 2: column-tiled vocab (nj == 2, two-pass online softmax) + lane padding
    #         of both vocab widths (tv=200 -> 256, cv=100 -> 128).
    run_case(tlen=4, batch=2, h=128, tv=200, s=128, cv=100, pad_idx=1, col_tile=128)

    print("KERNEL_OK")
</pallas_src>

<mosaic_0001>
module attributes {stable_mosaic.version = 11 : i64} {
  func.func @copy_generator_kernel(%arg0: i32, %arg1: i32, %arg2: i32, %arg3: memref<1x4x128xbf16, #tpu.memory_space<vmem>>, %arg4: memref<1x4x128xbf16, #tpu.memory_space<vmem>>, %arg5: memref<1x128x128xbf16, #tpu.memory_space<vmem>>, %arg6: memref<128x256xbf16, #tpu.memory_space<vmem>>, %arg7: memref<1x256xf32, #tpu.memory_space<vmem>>, %arg8: memref<128x128xbf16, #tpu.memory_space<vmem>>, %arg9: memref<1x128xf32, #tpu.memory_space<vmem>>, %arg10: memref<1x4x256xf32, #tpu.memory_space<vmem>>, %arg11: memref<1x4x128xf32, #tpu.memory_space<vmem>>, %arg12: memref<4x1xf32, #tpu.memory_space<vmem>>, %arg13: memref<4x1xf32, #tpu.memory_space<vmem>>, %arg14: memref<4x1xf32, #tpu.memory_space<vmem>>) attributes {dimension_semantics = [#tpu.dimension_semantics<parallel>, #tpu.dimension_semantics<parallel>, #tpu.dimension_semantics<arbitrary>], iteration_bounds = array<i64: 2, 1, 1>, scalar_prefetch = 0 : i64, scratch_operands = 3 : i64, tpu.core_type = #tpu.core_type<tc>, window_params = [{transform_indices = @transform_0, window_bounds = array<i64: 1, 4, 128>}, {transform_indices = @transform_1, window_bounds = array<i64: 1, 4, 128>}, {transform_indices = @transform_2, window_bounds = array<i64: 1, 128, 128>}, {pipeline_mode = #tpu.pipeline_mode<synchronous>, transform_indices = @transform_3, window_bounds = array<i64: 128, 256>}, {pipeline_mode = #tpu.pipeline_mode<synchronous>, transform_indices = @transform_4, window_bounds = array<i64: 1, 256>}, {pipeline_mode = #tpu.pipeline_mode<synchronous>, transform_indices = @transform_5, window_bounds = array<i64: 128, 128>}, {pipeline_mode = #tpu.pipeline_mode<synchronous>, transform_indices = @transform_6, window_bounds = array<i64: 1, 128>}, {transform_indices = @transform_7, window_bounds = array<i64: 1, 4, 256>}, {transform_indices = @transform_8, window_bounds = array<i64: 1, 4, 128>}]} {
    %c0 = arith.constant 0 : index
    %c0_0 = arith.constant 0 : index
    %c0_1 = arith.constant 0 : index
    %0 = vector.load %arg3[%c0, %c0_0, %c0_1] : memref<1x4x128xbf16, #tpu.memory_space<vmem>>, vector<1x4x128xbf16>
    %1 = vector.shape_cast %0 : vector<1x4x128xbf16> to vector<4x128xbf16>
    %c0_2 = arith.constant 0 : index
    %c0_3 = arith.constant 0 : index
    %2 = vector.load %arg6[%c0_2, %c0_3] : memref<128x256xbf16, #tpu.memory_space<vmem>>, vector<128x256xbf16>
    %cst = arith.constant dense<0.000000e+00> : vector<4x256xf32>
    %3 = tpu.matmul %1, %2, %cst {dimension_numbers = #tpu.dot_dimension_numbers<[1], [0], [0], [1], [0, 0, 1, 1], [], []>} : vector<4x128xbf16>, vector<128x256xbf16>, vector<4x256xf32> -> vector<4x256xf32>
    %c0_4 = arith.constant 0 : index
    %c0_5 = arith.constant 0 : index
    %4 = vector.load %arg7[%c0_4, %c0_5] : memref<1x256xf32, #tpu.memory_space<vmem>>, vector<1x256xf32>
    %5 = vector.broadcast %4 : vector<1x256xf32> to vector<4x256xf32>
    %6 = arith.addf %3, %5 : vector<4x256xf32>
    %c0_6 = arith.constant 0 : index
    %c0_7 = arith.constant 0 : index
    %7 = vector.load %arg8[%c0_6, %c0_7] : memref<128x128xbf16, #tpu.memory_space<vmem>>, vector<128x128xbf16>
    %cst_8 = arith.constant dense<0.000000e+00> : vector<4x128xf32>
    %8 = tpu.matmul %1, %7, %cst_8 {dimension_numbers = #tpu.dot_dimension_numbers<[1], [0], [0], [1], [0, 0, 1, 1], [], []>} : vector<4x128xbf16>, vector<128x128xbf16>, vector<4x128xf32> -> vector<4x128xf32>
    %c0_9 = arith.constant 0 : index
    %c0_10 = arith.constant 0 : index
    %9 = vector.load %arg9[%c0_9, %c0_10] : memref<1x128xf32, #tpu.memory_space<vmem>>, vector<1x128xf32>
    %10 = vector.broadcast %9 : vector<1x128xf32> to vector<4x128xf32>
    %11 = arith.addf %8, %10 : vector<4x128xf32>
    %cst_11 = arith.constant dense<0.000000e+00> : vector<4xf32>
    %12 = vector.multi_reduction <add>, %11, %cst_11 [1] : vector<4x128xf32> to vector<4xf32>
    %13 = vector.shape_cast %12 : vector<4xf32> to vector<4x1xf32>
    %14 = arith.negf %13 : vector<4x1xf32>
    %15 = math.exp %14 : vector<4x1xf32>
    %cst_12 = arith.constant 1.000000e+00 : f32
    %16 = vector.broadcast %cst_12 : f32 to vector<4x1xf32>
    %17 = arith.addf %16, %15 : vector<4x1xf32>
    %18 = arith.divf %16, %17 : vector<4x1xf32>
    %c0_13 = arith.constant 0 : index
    %c0_14 = arith.constant 0 : index
    %c0_15 = arith.constant 0 : index
    %19 = vector.load %arg4[%c0_13, %c0_14, %c0_15] : memref<1x4x128xbf16, #tpu.memory_space<vmem>>, vector<1x4x128xbf16>
    %20 = vector.shape_cast %19 : vector<1x4x128xbf16> to vector<4x128xbf16>
    %c0_16 = arith.constant 0 : index
    %c0_17 = arith.constant 0 : index
    %c0_18 = arith.constant 0 : index
    %21 = vector.load %arg5[%c0_16, %c0_17, %c0_18] : memref<1x128x128xbf16, #tpu.memory_space<vmem>>, vector<1x128x128xbf16>
    %22 = vector.shape_cast %21 : vector<1x128x128xbf16> to vector<128x128xbf16>
    %cst_19 = arith.constant dense<0.000000e+00> : vector<4x128xf32>
    %23 = tpu.matmul %20, %22, %cst_19 {dimension_numbers = #tpu.dot_dimension_numbers<[1], [0], [0], [1], [0, 0, 1, 1], [], []>} : vector<4x128xbf16>, vector<128x128xbf16>, vector<4x128xf32> -> vector<4x128xf32>
    %24 = vector.broadcast %18 : vector<4x1xf32> to vector<4x128xf32>
    %25 = arith.mulf %24, %23 : vector<4x128xf32>
    %c0_20 = arith.constant 0 : index
    %c0_21 = arith.constant 0 : index
    %c0_22 = arith.constant 0 : index
    %26 = vector.load %arg11[%c0_20, %c0_21, %c0_22] : memref<1x4x128xf32, #tpu.memory_space<vmem>>, vector<1x4x128xf32>
    %27 = vector.shape_cast %26 : vector<1x4x128xf32> to vector<4x128xf32>
    %28 = vector.shape_cast %25 : vector<4x128xf32> to vector<1x4x128xf32>
    tpu.vector_store %arg11[%c0_20, %c0_21, %c0_22], %28 {strides = array<i32>} : memref<1x4x128xf32, #tpu.memory_space<vmem>>, vector<1x4x128xf32>,
    %cst_23 = arith.constant dense<0xFF800000> : vector<4xf32>
    %29 = vector.multi_reduction <maximumf>, %6, %cst_23 [1] : vector<4x256xf32> to vector<4xf32>
    %30 = vector.shape_cast %29 : vector<4xf32> to vector<4x1xf32>
    %31 = vector.broadcast %30 : vector<4x1xf32> to vector<4x256xf32>
    %32 = arith.subf %6, %31 : vector<4x256xf32>
    %33 = math.exp %32 : vector<4x256xf32>
    %cst_24 = arith.constant 1.000000e+00 : f32
    %34 = vector.broadcast %cst_24 : f32 to vector<4x1xf32>
    %35 = arith.subf %34, %18 : vector<4x1xf32>
    %cst_25 = arith.constant dense<0.000000e+00> : vector<4xf32>
    %36 = vector.multi_reduction <add>, %33, %cst_25 [1] : vector<4x256xf32> to vector<4xf32>
    %37 = vector.shape_cast %36 : vector<4xf32> to vector<4x1xf32>
    %38 = tpu.reciprocal %37 {approx = true} : vector<4x1xf32> -> vector<4x1xf32>
    %39 = arith.mulf %35, %38 : vector<4x1xf32>
    %40 = vector.broadcast %39 : vector<4x1xf32> to vector<4x256xf32>
    %41 = arith.mulf %33, %40 : vector<4x256xf32>
    %c0_26 = arith.constant 0 : index
    %c0_27 = arith.constant 0 : index
    %c0_28 = arith.constant 0 : index
    %42 = vector.load %arg10[%c0_26, %c0_27, %c0_28] : memref<1x4x256xf32, #tpu.memory_space<vmem>>, vector<1x4x256xf32>
    %43 = vector.shape_cast %42 : vector<1x4x256xf32> to vector<4x256xf32>
    %44 = vector.shape_cast %41 : vector<4x256xf32> to vector<1x4x256xf32>
    tpu.vector_store %arg10[%c0_26, %c0_27, %c0_28], %44 {strides = array<i32>} : memref<1x4x256xf32, #tpu.memory_space<vmem>>, vector<1x4x256xf32>,
    return
  }
  func.func @transform_0(%arg0: i32, %arg1: i32, %arg2: i32) -> (i32, i32, i32) {
    %c0_i32 = arith.constant 0 : i32
    %c0_i32_0 = arith.constant 0 : i32
    return %arg0, %arg1, %c0_i32 : i32, i32, i32
  }
  func.func @transform_1(%arg0: i32, %arg1: i32, %arg2: i32) -> (i32, i32, i32) {
    %c0_i32 = arith.constant 0 : i32
    %c0_i32_0 = arith.constant 0 : i32
    return %arg0, %arg1, %c0_i32 : i32, i32, i32
  }
  func.func @transform_2(%arg0: i32, %arg1: i32, %arg2: i32) -> (i32, i32, i32) {
    %c0_i32 = arith.constant 0 : i32
    %c0_i32_0 = arith.constant 0 : i32
    %c0_i32_1 = arith.constant 0 : i32
    return %arg0, %c0_i32, %c0_i32_0 : i32, i32, i32
  }
  func.func @transform_3(%arg0: i32, %arg1: i32, %arg2: i32) -> (i32, i32) {
    %c0_i32 = arith.constant 0 : i32
    %c0_i32_0 = arith.constant 0 : i32
    %c0_i32_1 = arith.constant 0 : i32
    return %c0_i32, %c0_i32_0 : i32, i32
  }
  func.func @transform_4(%arg0: i32, %arg1: i32, %arg2: i32) -> (i32, i32) {
    %c0_i32 = arith.constant 0 : i32
    %c0_i32_0 = arith.constant 0 : i32
    %c0_i32_1 = arith.constant 0 : i32
    return %c0_i32, %c0_i32_0 : i32, i32
  }
  func.func @transform_5(%arg0: i32, %arg1: i32, %arg2: i32) -> (i32, i32) {
    %c0_i32 = arith.constant 0 : i32
    %c0_i32_0 = arith.constant 0 : i32
    %c0_i32_1 = arith.constant 0 : i32
    return %c0_i32, %c0_i32_0 : i32, i32
  }
  func.func @transform_6(%arg0: i32, %arg1: i32, %arg2: i32) -> (i32, i32) {
    %c0_i32 = arith.constant 0 : i32
    %c0_i32_0 = arith.constant 0 : i32
    %c0_i32_1 = arith.constant 0 : i32
    return %c0_i32, %c0_i32_0 : i32, i32
  }
  func.func @transform_7(%arg0: i32, %arg1: i32, %arg2: i32) -> (i32, i32, i32) {
    %c0_i32 = arith.constant 0 : i32
    %c0_i32_0 = arith.constant 0 : i32
    return %arg0, %arg1, %c0_i32 : i32, i32, i32
  }
  func.func @transform_8(%arg0: i32, %arg1: i32, %arg2: i32) -> (i32, i32, i32) {
    %c0_i32 = arith.constant 0 : i32
    %c0_i32_0 = arith.constant 0 : i32
    return %arg0, %arg1, %c0_i32 : i32, i32, i32
  }
}

</mosaic_0001>

<llo_original>
// kernel: tpu_custom_call.1
$region0: #{tpu_custom_call.1}
  #allocation0 [shape = 'u32[]', space=smem, size = 0x4, offset = 0x4, fixed_abs, tag = 'smem constant byte address 0x4 - core index']
  #allocation1 [shape = 'u32[144,128]{1,0:T(1,128)}', space=vmem, size = 0x12000, scoped, tag = 'internal scratch']
  #allocation2 [shape = 'f32[4,1]{1,0:T(4,128)}', space=vmem, size = 0x800, scoped, tag = 'scratch operand']
  #allocation3 [shape = 'f32[4,1]{1,0:T(4,128)}', space=vmem, size = 0x800, scoped, tag = 'scratch operand']
  #allocation4 [shape = 'f32[4,1]{1,0:T(4,128)}', space=vmem, size = 0x800, scoped, tag = 'scratch operand']
  %s0 = inlined_call_operand.hbm [shape: bf16[2,4,128], index: 0, kind: input, shape index: {}]
  %s1 = inlined_call_operand.hbm [shape: bf16[2,4,128], index: 1, kind: input, shape index: {}]
  %s2 = inlined_call_operand.hbm [shape: bf16[2,128,128], index: 2, kind: input, shape index: {}]
  %s3 = inlined_call_operand.hbm [shape: bf16[128,256], index: 3, kind: input, shape index: {}]
  %s4 = inlined_call_operand.vmem [shape: f32[1,256], index: 4, kind: input, shape index: {}]
  %s5 = inlined_call_operand.hbm [shape: bf16[128,128], index: 5, kind: input, shape index: {}]
  %s6 = inlined_call_operand.vmem [shape: f32[1,128], index: 6, kind: input, shape index: {}]
  %s7 = inlined_call_operand.hbm [shape: f32[2,4,256], index: 7, kind: output, shape index: {0}]
  %s8 = inlined_call_operand.hbm [shape: f32[2,4,128], index: 8, kind: output, shape index: {1}]
  %9 = xla_tuple %s7, %s8
  %s10 = sld [smem:[#allocation0]]
  $region89: #{tpu_custom_call.1} parent=0
    _
  %s12 = ssub.s32 1, %s10
  %s13 = scalar_select 0, %s12, %s10
  $region1: #{tpu_custom_call.1} parent=0
    #allocation5 [shape = 'u8[2048]{0}', space=vmem, size = 0x800, scoped, tag = 'input window, operand 0']
    #allocation6 [shape = 's32[2]{0}', space=sflag, size = 0x8, scoped, tag = 'scoped memory for tpu_custom_call.1']
    #allocation7 [shape = 's32[2]{0}', space=sflag, size = 0x8, scoped, tag = 'scoped memory for tpu_custom_call.1']
    #allocation8 [shape = 'u8[2048]{0}', space=vmem, size = 0x800, scoped, tag = 'input window, operand 1']
    #allocation9 [shape = 's32[2]{0}', space=sflag, size = 0x8, scoped, tag = 'scoped memory for tpu_custom_call.1']
    #allocation10 [shape = 'u8[65536]{0}', space=vmem, size = 0x10000, scoped, tag = 'input window, operand 2']
    #allocation11 [shape = 'u8[65536]{0}', space=vmem, size = 0x10000, scoped, tag = 'input window, operand 3, single buffered']
    #allocation12 [shape = 's32[1]{0}', space=sflag, size = 0x4, scoped, tag = 'scoped memory for tpu_custom_call.1']
    #allocation13 [shape = 'u8[32768]{0}', space=vmem, size = 0x8000, scoped, tag = 'input window, operand 5, single buffered']
    #allocation14 [shape = 'u8[8192]{0}', space=vmem, size = 0x2000, scoped, tag = 'output window, operand 0']
    #allocation15 [shape = 'u8[4096]{0}', space=vmem, size = 0x1000, scoped, tag = 'output window, operand 1']
    #allocation16 [shape = 's32[2]{0}', space=sflag, size = 0x8, scoped, tag = 'scoped memory for tpu_custom_call.1']
    %14 = vsyncpa [#allocation6], 0
    %s15 = scalar_lea.sflag [#allocation6], 1
    %16 = vsyncpa %s15, 0
    %17 = vsyncpa [#allocation9], 0
    %s18 = scalar_lea.sflag [#allocation9], 1
    %19 = vsyncpa %s18, 0
    %20 = vsyncpa [#allocation12], 0
    %21 = vsyncpa [#allocation7], 0
    %s22 = scalar_lea.sflag [#allocation7], 1
    %23 = vsyncpa %s22, 0
    %24 = vsyncpa [#allocation16], 0
    %s25 = scalar_lea.sflag [#allocation16], 1
    %26 = vsyncpa %s25, 0
    loop: start=0, step=1, limit=4
    $region2: #{tpu_custom_call.1} parent=1 // loop_pre_header
      _
    $region3: #{tpu_custom_call.1} parent=1 // loop_header
      %s28 = sphi 0, %s32
      %p29 = scmp.ge.s32.totalorder %s28, 4
      %s35 = sphi 0, %s54
      %s36 = sphi 0, %s50
      %s37 = sphi 0, %s46
      %s38 = sphi 0, %s35
      %s39 = sphi 0, %s36
      %s40 = sphi 0, %s37
      %s41 = sphi 0, %s38
      %s42 = sphi 0, %s39
      %s43 = sphi 0, %s40
      %s59 = sphi 0, %s61
      %s62 = sphi 0, %s59
      %s63 = sphi 0, %s62
      %s79 = sphi 0, %s63
      %s87 = sphi 0, %s89
      %s90 = sphi 0, %s87
      %s91 = sphi 0, %s90
      %s107 = sphi 0, %s91
      %s113 = sphi 0, %s115
      %s116 = sphi 0, %s113
      %s117 = sphi 0, %s116
      %s133 = sphi 0, %s117
      %s137 = sphi 0, %s137
      %s139 = sphi 0, %s137
      %s140 = sphi 0, %s139
      %s154 = sphi 0, %s140
      %s158 = sphi 0, %s158
      %s160 = sphi 0, %s158
      %s161 = sphi 0, %s160
      %s175 = sphi 0, %s161
      %s179 = sphi 0, %s179
      %s181 = sphi 0, %s179
      %s182 = sphi 0, %s181
      %s196 = sphi 0, %s182
      %s200 = sphi 0, %s200
      %s202 = sphi 0, %s200
      %s203 = sphi 0, %s202
      %s217 = sphi 0, %s203
      %s225 = sphi 0, %s227
      %s228 = sphi 0, %s225
      %s229 = sphi 0, %s228
      %s245 = sphi 0, %s229
      %s253 = sphi 0, %s255
      %s256 = sphi 0, %s253
      %s257 = sphi 0, %s256
      %s273 = sphi 0, %s257
    $region4: #{tpu_custom_call.1} parent=1 // loop_header_branch
      %31 = sbr.rel (%p29) target = $region8
    $region5: #{tpu_custom_call.1} parent=1 // loop_body
      %s33 = ssub.s32 %s28, 1
      %s34 = ssub.s32 %s28, 2
      %s44 = sadd.s32 1, %s37
      %p45 = scmp.ge.s32.totalorder %s44, 1
      %s46 = scalar_select %p45, 0, %s44
      %s47 = sadd.s32 1, %s36
      %s48 = scalar_select %p45, %s47, %s36
      %p49 = scmp.ge.s32.totalorder %s48, 1
      %s50 = scalar_select %p49, 0, %s48
      %s51 = sadd.s32 1, %s35
      %s52 = scalar_select %p49, %s51, %s35
      %p53 = scmp.ge.s32.totalorder %s52, 2
      %s54 = scalar_select %p53, 0, %s52
      %s55 = ssub.s32 %s35, %s54
      %s56 = ssub.s32 %s36, %s50
      %s57 = sor.u32 %s55, %s56
      %p58 = scmp.eq.s32.totalorder %s57, 0
      %s60 = sadd.s32 %s59, 1
      %s61 = scalar_select %p58, %s59, %s60
      %p64 = pneg %p58
      %p65 = scmp.eq.s32.totalorder %s28, 1
      %p66 = por %p64, %p65
      %p67 = scmp.ne.s32.totalorder %s59, %s62
      %p68 = scmp.eq.s32.totalorder %s28, 0
      %p69 = por %p67, %p68
      %p70 = scmp.ne.s32.totalorder %s59, %s62
      %p71 = scmp.eq.s32.totalorder %s33, 1
      %p72 = por %p70, %p71
      %p73 = scmp.ne.s32.totalorder %s62, %s63
      %p74 = scmp.eq.s32.totalorder %s33, 0
      %p75 = por %p73, %p74
      %p76 = scmp.ne.s32.totalorder %s62, %s63
      %p77 = scmp.eq.s32.totalorder %s34, 1
      %p78 = por %p76, %p77
      %p80 = scmp.ne.s32.totalorder %s63, %s79
      %p81 = scmp.eq.s32.totalorder %s34, 0
      %p82 = por %p80, %p81
      %s83 = ssub.s32 %s35, %s54
      %s84 = ssub.s32 %s36, %s50
      %s85 = sor.u32 %s83, %s84
      %p86 = scmp.eq.s32.totalorder %s85, 0
      %s88 = sadd.s32 %s87, 1
      %s89 = scalar_select %p86, %s87, %s88
      %p92 = pneg %p86
      %p93 = scmp.eq.s32.totalorder %s28, 1
      %p94 = por %p92, %p93
      %p95 = scmp.ne.s32.totalorder %s87, %s90
      %p96 = scmp.eq.s32.totalorder %s28, 0
      %p97 = por %p95, %p96
      %p98 = scmp.ne.s32.totalorder %s87, %s90
      %p99 = scmp.eq.s32.totalorder %s33, 1
      %p100 = por %p98, %p99
      %p101 = scmp.ne.s32.totalorder %s90, %s91
      %p102 = scmp.eq.s32.totalorder %s33, 0
      %p103 = por %p101, %p102
      %p104 = scmp.ne.s32.totalorder %s90, %s91
      %p105 = scmp.eq.s32.totalorder %s34, 1
      %p106 = por %p104, %p105
      %p108 = scmp.ne.s32.totalorder %s91, %s107
      %p109 = scmp.eq.s32.totalorder %s34, 0
      %p110 = por %p108, %p109
      %s111 = ssub.s32 %s35, %s54
      %p112 = scmp.eq.s32.totalorder %s111, 0
      %s114 = sadd.s32 %s113, 1
      %s115 = scalar_select %p112, %s113, %s114
      %p118 = pneg %p112
      %p119 = scmp.eq.s32.totalorder %s28, 1
      %p120 = por %p118, %p119
      %p121 = scmp.ne.s32.totalorder %s113, %s116
      %p122 = scmp.eq.s32.totalorder %s28, 0
      %p123 = por %p121, %p122
      %p124 = scmp.ne.s32.totalorder %s113, %s116
      %p125 = scmp.eq.s32.totalorder %s33, 1
      %p126 = por %p124, %p125
      %p127 = scmp.ne.s32.totalorder %s116, %s117
      %p128 = scmp.eq.s32.totalorder %s33, 0
      %p129 = por %p127, %p128
      %p130 = scmp.ne.s32.totalorder %s116, %s117
      %p131 = scmp.eq.s32.totalorder %s34, 1
      %p132 = por %p130, %p131
      %p134 = scmp.ne.s32.totalorder %s117, %s133
      %p135 = scmp.eq.s32.totalorder %s34, 0
      %p136 = por %p134, %p135
      %s138 = sadd.s32 %s137, 1
      %p141 = scmp.eq.s32.totalorder %s28, 1
      %p142 = scmp.ne.s32.totalorder %s137, %s139
      %p143 = scmp.eq.s32.totalorder %s28, 0
      %p144 = por %p142, %p143
      %p145 = scmp.ne.s32.totalorder %s137, %s139
      %p146 = scmp.eq.s32.totalorder %s33, 1
      %p147 = por %p145, %p146
      %p148 = scmp.ne.s32.totalorder %s139, %s140
      %p149 = scmp.eq.s32.totalorder %s33, 0
      %p150 = por %p148, %p149
      %p151 = scmp.ne.s32.totalorder %s139, %s140
      %p152 = scmp.eq.s32.totalorder %s34, 1
      %p153 = por %p151, %p152
      %p155 = scmp.ne.s32.totalorder %s140, %s154
      %p156 = scmp.eq.s32.totalorder %s34, 0
      %p157 = por %p155, %p156
      %s159 = sadd.s32 %s158, 1
      %p162 = scmp.eq.s32.totalorder %s28, 1
      %p163 = scmp.ne.s32.totalorder %s158, %s160
      %p164 = scmp.eq.s32.totalorder %s28, 0
      %p165 = por %p163, %p164
      %p166 = scmp.ne.s32.totalorder %s158, %s160
      %p167 = scmp.eq.s32.totalorder %s33, 1
      %p168 = por %p166, %p167
      %p169 = scmp.ne.s32.totalorder %s160, %s161
      %p170 = scmp.eq.s32.totalorder %s33, 0
      %p171 = por %p169, %p170
      %p172 = scmp.ne.s32.totalorder %s160, %s161
      %p173 = scmp.eq.s32.totalorder %s34, 1
      %p174 = por %p172, %p173
      %p176 = scmp.ne.s32.totalorder %s161, %s175
      %p177 = scmp.eq.s32.totalorder %s34, 0
      %p178 = por %p176, %p177
      %s180 = sadd.s32 %s179, 1
      %p183 = scmp.eq.s32.totalorder %s28, 1
      %p184 = scmp.ne.s32.totalorder %s179, %s181
      %p185 = scmp.eq.s32.totalorder %s28, 0
      %p186 = por %p184, %p185
      %p187 = scmp.ne.s32.totalorder %s179, %s181
      %p188 = scmp.eq.s32.totalorder %s33, 1
      %p189 = por %p187, %p188
      %p190 = scmp.ne.s32.totalorder %s181, %s182
      %p191 = scmp.eq.s32.totalorder %s33, 0
      %p192 = por %p190, %p191
      %p193 = scmp.ne.s32.totalorder %s181, %s182
      %p194 = scmp.eq.s32.totalorder %s34, 1
      %p195 = por %p193, %p194
      %p197 = scmp.ne.s32.totalorder %s182, %s196
      %p198 = scmp.eq.s32.totalorder %s34, 0
      %p199 = por %p197, %p198
      %s201 = sadd.s32 %s200, 1
      %p204 = scmp.eq.s32.totalorder %s28, 1
      %p205 = scmp.ne.s32.totalorder %s200, %s202
      %p206 = scmp.eq.s32.totalorder %s28, 0
      %p207 = por %p205, %p206
      %p208 = scmp.ne.s32.totalorder %s200, %s202
      %p209 = scmp.eq.s32.totalorder %s33, 1
      %p210 = por %p208, %p209
      %p211 = scmp.ne.s32.totalorder %s202, %s203
      %p212 = scmp.eq.s32.totalorder %s33, 0
      %p213 = por %p211, %p212
      %p214 = scmp.ne.s32.totalorder %s202, %s203
      %p215 = scmp.eq.s32.totalorder %s34, 1
      %p216 = por %p214, %p215
      %p218 = scmp.ne.s32.totalorder %s203, %s217
      %p219 = scmp.eq.s32.totalorder %s34, 0
      %p220 = por %p218, %p219
      %s221 = ssub.s32 %s35, %s54
      %s222 = ssub.s32 %s36, %s50
      %s223 = sor.u32 %s221, %s222
      %p224 = scmp.eq.s32.totalorder %s223, 0
      %s226 = sadd.s32 %s225, 1
      %s227 = scalar_select %p224, %s225, %s226
      %p230 = pneg %p224
      %p231 = scmp.eq.s32.totalorder %s28, 1
      %p232 = por %p230, %p231
      %p233 = scmp.ne.s32.totalorder %s225, %s228
      %p234 = scmp.eq.s32.totalorder %s28, 0
      %p235 = por %p233, %p234
      %p236 = scmp.ne.s32.totalorder %s225, %s228
      %p237 = scmp.eq.s32.totalorder %s33, 1
      %p238 = por %p236, %p237
      %p239 = scmp.ne.s32.totalorder %s228, %s229
      %p240 = scmp.eq.s32.totalorder %s33, 0
      %p241 = por %p239, %p240
      %p242 = scmp.ne.s32.totalorder %s228, %s229
      %p243 = scmp.eq.s32.totalorder %s34, 1
      %p244 = por %p242, %p243
      %p246 = scmp.ne.s32.totalorder %s229, %s245
      %p247 = scmp.eq.s32.totalorder %s34, 0
      %p248 = por %p246, %p247
      %s249 = ssub.s32 %s35, %s54
      %s250 = ssub.s32 %s36, %s50
      %s251 = sor.u32 %s249, %s250
      %p252 = scmp.eq.s32.totalorder %s251, 0
      %s254 = sadd.s32 %s253, 1
      %s255 = scalar_select %p252, %s253, %s254
      %p258 = pneg %p252
      %p259 = scmp.eq.s32.totalorder %s28, 1
      %p260 = por %p258, %p259
      %p261 = scmp.ne.s32.totalorder %s253, %s256
      %p262 = scmp.eq.s32.totalorder %s28, 0
      %p263 = por %p261, %p262
      %p264 = scmp.ne.s32.totalorder %s253, %s256
      %p265 = scmp.eq.s32.totalorder %s33, 1
      %p266 = por %p264, %p265
      %p267 = scmp.ne.s32.totalorder %s256, %s257
      %p268 = scmp.eq.s32.totalorder %s33, 0
      %p269 = por %p267, %p268
      %p270 = scmp.ne.s32.totalorder %s256, %s257
      %p271 = scmp.eq.s32.totalorder %s34, 1
      %p272 = por %p270, %p271
      %p274 = scmp.ne.s32.totalorder %s257, %s273
      %p275 = scmp.eq.s32.totalorder %s34, 0
      %p276 = por %p274, %p275
      %p277 = scmp.le.s32.totalorder 1, %s28
      %p278 = scmp.lt.s32.totalorder %s28, 3
      %p279 = pnand %p277, %p278
      %p280 = pneg %p279
      // Predicated region
      $region9: #{tpu_custom_call.1} parent=5 // pred_check
        _
      $region10: #{tpu_custom_call.1} parent=5 // pred_check_branch
        %282 = sbr.rel (%p279) target = $region12
      $region11: #{tpu_custom_call.1} parent=5 // pred_region
        %s283 = ssub.s32 %s28, 1
        // Predicated region
        $region13: #{tpu_custom_call.1} parent=11 // pred_check
          %p284 = pneg %p150
        $region14: #{tpu_custom_call.1} parent=11 // pred_check_branch
          %286 = sbr.rel (%p284) target = $region16
        $region15: #{tpu_custom_call.1} parent=11 // pred_region
          %s288 = ssub.s32 2048, 2048
          %289 = vsyncadd [#allocation12], %s288
          %s290 = sshll.u32 [#allocation11], 4
          %s291 = int_to_ptr.vmem [resolvable:$true] %s290
          %296 = dma.hbm_to_vmem [thread:$0]  %s3, 2048, %s291, [#allocation12], 128, 128, 8
        $region16: #{tpu_custom_call.1} parent=11 // pred_fallthru
          _
        // Predicated region
        $region17: #{tpu_custom_call.1} parent=11 // pred_check
          %p297 = pneg %p171
        $region18: #{tpu_custom_call.1} parent=11 // pred_check_branch
          %299 = sbr.rel (%p297) target = $region20
        $region19: #{tpu_custom_call.1} parent=11 // pred_region
          _
        $region20: #{tpu_custom_call.1} parent=11 // pred_fallthru
          _
        // Predicated region
        $region21: #{tpu_custom_call.1} parent=11 // pred_check
          %p300 = pneg %p192
        $region22: #{tpu_custom_call.1} parent=11 // pred_check_branch
          %302 = sbr.rel (%p300) target = $region24
        $region23: #{tpu_custom_call.1} parent=11 // pred_region
          %s304 = ssub.s32 1024, 1024
          %305 = vsyncadd [#allocation12], %s304
          %s306 = sshll.u32 [#allocation13], 4
          %s307 = int_to_ptr.vmem [resolvable:$true] %s306
          %312 = dma.hbm_to_vmem [thread:$0]  %s5, 1024, %s307, [#allocation12], 64, 64, 4
        $region24: #{tpu_custom_call.1} parent=11 // pred_fallthru
          _
        // Predicated region
        $region25: #{tpu_custom_call.1} parent=11 // pred_check
          %p313 = pneg %p213
        $region26: #{tpu_custom_call.1} parent=11 // pred_check_branch
          %315 = sbr.rel (%p313) target = $region28
        $region27: #{tpu_custom_call.1} parent=11 // pred_region
          _
        $region28: #{tpu_custom_call.1} parent=11 // pred_fallthru
          _
      $region12: #{tpu_custom_call.1} parent=5 // pred_fallthru
        _
      %p316 = scmp.lt.s32.totalorder %s28, 2
      // Predicated region
      $region29: #{tpu_custom_call.1} parent=5 // pred_check
        %p317 = pneg %p316
      $region30: #{tpu_custom_call.1} parent=5 // pred_check_branch
        %319 = sbr.rel (%p317) target = $region32
      $region31: #{tpu_custom_call.1} parent=5 // pred_region
        // Predicated region
        $region33: #{tpu_custom_call.1} parent=31 // pred_check
          %p320 = pneg %p69
        $region34: #{tpu_custom_call.1} parent=31 // pred_check_branch
          %322 = sbr.rel (%p320) target = $region36
        $region35: #{tpu_custom_call.1} parent=31 // pred_region
          %s323 = sand.u32 %s59, 1
          %s324 = scalar_lea.sflag [#allocation6], %s323
          %s325 = sand.u32 %s59, 1
          %s326 = smul.addr %s325, 2
          %s327 = scalar_lea.vmem [#allocation5], %s326
          %s329 = ssub.s32 32, 32
          %330 = vsyncadd %s324, %s329
          %s331 = sadd.s32 %s36, %s35
          %s332 = smul.addr %s331, 32
          %s333 = scalar_lea.hbm %s0, %s332
          %s335 = sshll.u32 %s327, 4
          %s336 = int_to_ptr.vmem [resolvable:$true] %s335
          %338 = dma.hbm_to_vmem [thread:$0]  %s333, 32, %s336, %s324
        $region36: #{tpu_custom_call.1} parent=31 // pred_fallthru
          _
        // Predicated region
        $region37: #{tpu_custom_call.1} parent=31 // pred_check
          %p339 = pneg %p97
        $region38: #{tpu_custom_call.1} parent=31 // pred_check_branch
          %341 = sbr.rel (%p339) target = $region40
        $region39: #{tpu_custom_call.1} parent=31 // pred_region
          %s342 = sand.u32 %s28, 1
          %s343 = scalar_lea.sflag [#allocation9], %s342
          %s344 = sand.u32 %s87, 1
          %s345 = smul.addr %s344, 2
          %s346 = scalar_lea.vmem [#allocation8], %s345
          %s348 = ssub.s32 32, 32
          %349 = vsyncadd %s343, %s348
          %s350 = sadd.s32 %s36, %s35
          %s351 = smul.addr %s350, 32
          %s352 = scalar_lea.hbm %s1, %s351
          %s354 = sshll.u32 %s346, 4
          %s355 = int_to_ptr.vmem [resolvable:$true] %s354
          %357 = dma.hbm_to_vmem [thread:$0]  %s352, 32, %s355, %s343
        $region40: #{tpu_custom_call.1} parent=31 // pred_fallthru
          _
        // Predicated region
        $region41: #{tpu_custom_call.1} parent=31 // pred_check
          %p358 = pneg %p123
        $region42: #{tpu_custom_call.1} parent=31 // pred_check_branch
          %360 = sbr.rel (%p358) target = $region44
        $region43: #{tpu_custom_call.1} parent=31 // pred_region
          %s361 = sand.u32 %s28, 1
          %s362 = scalar_lea.sflag [#allocation9], %s361
          %s363 = sand.u32 %s113, 1
          %s364 = smul.addr %s363, 64
          %s365 = scalar_lea.vmem [#allocation10], %s364
          %s367 = ssub.s32 1024, 1024
          %368 = vsyncadd %s362, %s367
          %s369 = smul.addr %s35, 16
          %s370 = smul.addr %s369, 64
          %s371 = scalar_lea.hbm %s2, %s370
          %s372 = sshll.u32 %s365, 4
          %s373 = int_to_ptr.vmem [resolvable:$true] %s372
          %378 = dma.hbm_to_vmem [thread:$0]  %s371, 1024, %s373, %s362, 64, 64, 4
        $region44: #{tpu_custom_call.1} parent=31 // pred_fallthru
          _
      $region32: #{tpu_custom_call.1} parent=5 // pred_fallthru
        _
      %p379 = scmp.le.s32.totalorder 1, %s28
      %p380 = scmp.lt.s32.totalorder %s28, 3
      %p381 = pnand %p379, %p380
      %p382 = pneg %p381
      // Predicated region
      $region45: #{tpu_custom_call.1} parent=5 // pred_check
        _
      $region46: #{tpu_custom_call.1} parent=5 // pred_check_branch
        %384 = sbr.rel (%p381) target = $region48
      $region47: #{tpu_custom_call.1} parent=5 // pred_region
        %s385 = ssub.s32 %s28, 1
        %s386 = sand.u32 %s62, 1
        %s387 = scalar_lea.sflag [#allocation6], %s386
        %s388 = sand.u32 %s62, 1
        %s389 = smul.addr %s388, 2
        %s390 = scalar_lea.vmem [#allocation5], %s389
        // Predicated region
        $region49: #{tpu_custom_call.1} parent=47 // pred_check
          %p391 = pneg %p75
        $region50: #{tpu_custom_call.1} parent=47 // pred_check_branch
          %393 = sbr.rel (%p391) target = $region52
        $region51: #{tpu_custom_call.1} parent=47 // pred_region
          %394 = dma.done %s387, 32
        $region52: #{tpu_custom_call.1} parent=47 // pred_fallthru
          _
        %s395 = sand.u32 %s33, 1
        %s396 = scalar_lea.sflag [#allocation9], %s395
        %s397 = sand.u32 %s90, 1
        %s398 = smul.addr %s397, 2
        %s399 = scalar_lea.vmem [#allocation8], %s398
        // Predicated region
        $region53: #{tpu_custom_call.1} parent=47 // pred_check
          %p400 = pneg %p103
        $region54: #{tpu_custom_call.1} parent=47 // pred_check_branch
          %402 = sbr.rel (%p400) target = $region56
        $region55: #{tpu_custom_call.1} parent=47 // pred_region
          %403 = dma.done %s396, 32
        $region56: #{tpu_custom_call.1} parent=47 // pred_fallthru
          _
        %s404 = sand.u32 %s33, 1
        %s405 = scalar_lea.sflag [#allocation9], %s404
        %s406 = sand.u32 %s116, 1
        %s407 = smul.addr %s406, 64
        %s408 = scalar_lea.vmem [#allocation10], %s407
        // Predicated region
        $region57: #{tpu_custom_call.1} parent=47 // pred_check
          %p409 = pneg %p129
        $region58: #{tpu_custom_call.1} parent=47 // pred_check_branch
          %411 = sbr.rel (%p409) target = $region60
        $region59: #{tpu_custom_call.1} parent=47 // pred_region
          %412 = dma.done %s405, 1024
        $region60: #{tpu_custom_call.1} parent=47 // pred_fallthru
          _
        // Predicated region
        $region61: #{tpu_custom_call.1} parent=47 // pred_check
          %p413 = pneg %p150
        $region62: #{tpu_custom_call.1} parent=47 // pred_check_branch
          %415 = sbr.rel (%p413) target = $region64
        $region63: #{tpu_custom_call.1} parent=47 // pred_region
          %416 = dma.done [#allocation12], 2048
        $region64: #{tpu_custom_call.1} parent=47 // pred_fallthru
          _
        // Predicated region
        $region65: #{tpu_custom_call.1} parent=47 // pred_check
          %p417 = pneg %p192
        $region66: #{tpu_custom_call.1} parent=47 // pred_check_branch
          %419 = sbr.rel (%p417) target = $region68
        $region67: #{tpu_custom_call.1} parent=47 // pred_region
          %420 = dma.done [#allocation12], 1024
        $region68: #{tpu_custom_call.1} parent=47 // pred_fallthru
          _
        %s421 = sand.u32 %s62, 1
        %s422 = scalar_lea.sflag [#allocation6], %s421
        %s423 = sand.u32 %s62, 1
        %s424 = smul.addr %s423, 2
        %s425 = scalar_lea.vmem [#allocation5], %s424
        %p426 = pneg %p75
        %p427 = pneg %p72
        %s428 = sand.u32 %s33, 1
        %s429 = scalar_lea.sflag [#allocation9], %s428
        %s430 = sand.u32 %s90, 1
        %s431 = smul.addr %s430, 2
        %s432 = scalar_lea.vmem [#allocation8], %s431
        %p433 = pneg %p103
        %p434 = pneg %p100
        %s435 = sand.u32 %s33, 1
        %s436 = scalar_lea.sflag [#allocation9], %s435
        %s437 = sand.u32 %s116, 1
        %s438 = smul.addr %s437, 64
        %s439 = scalar_lea.vmem [#allocation10], %s438
        %p440 = pneg %p129
        %p441 = pneg %p126
        %p442 = pneg %p150
        %p443 = pneg %p147
        %p444 = pneg %p171
        %p445 = pneg %p168
        %p446 = pneg %p192
        %p447 = pneg %p189
        %p448 = pneg %p213
        %p449 = pneg %p210
        %p450 = pneg %p241
        %p451 = pneg %p238
        %s452 = sand.u32 %s228, 1
        %s453 = scalar_lea.sflag [#allocation7], %s452
        %s454 = sand.u32 %s228, 1
        %s455 = smul.addr %s454, 8
        %s456 = scalar_lea.vmem [#allocation14], %s455
        %p457 = pneg %p269
        %p458 = pneg %p266
        %s459 = sand.u32 %s256, 1
        %s460 = scalar_lea.sflag [#allocation16], %s459
        %s461 = sand.u32 %s256, 1
        %s462 = smul.addr %s461, 4
        %s463 = scalar_lea.vmem [#allocation15], %s462
        %v465 = vld [vmem:[%s390] sm:$0x3]
        %v466 = vld [vmem:[#allocation11] sm:$0xff]
        %v467 = vld [vmem:[#allocation11 + $0x8] sm:$0xff]
        %v468 = vld [vmem:[#allocation11 + $0x10] sm:$0xff]
        %v469 = vld [vmem:[#allocation11 + $0x18] sm:$0xff]
        %v470 = vld [vmem:[#allocation11 + $0x20] sm:$0xff]
        %v471 = vld [vmem:[#allocation11 + $0x28] sm:$0xff]
        %v472 = vld [vmem:[#allocation11 + $0x30] sm:$0xff]
        %v473 = vld [vmem:[#allocation11 + $0x38] sm:$0xff]
        %v474 = vld [vmem:[#allocation11 + $0x40] sm:$0xff]
        %v475 = vld [vmem:[#allocation11 + $0x48] sm:$0xff]
        %v476 = vld [vmem:[#allocation11 + $0x50] sm:$0xff]
        %v477 = vld [vmem:[#allocation11 + $0x58] sm:$0xff]
        %v478 = vld [vmem:[#allocation11 + $0x60] sm:$0xff]
        %v479 = vld [vmem:[#allocation11 + $0x68] sm:$0xff]
        %v480 = vld [vmem:[#allocation11 + $0x70] sm:$0xff]
        %v481 = vld [vmem:[#allocation11 + $0x78] sm:$0xff]
        %v482 = vld [vmem:[%s4] sm:$0x3]
        %v484 = vlaneseq
        %v485 = vshrl.u32 %v484, 7
        %v486 = vsub.s32 0, %v485
        %v487 = vrot.slane %v482, %v486
        %v488 = vlaneseq
        %v489 = vshrl.u32 %v488, 7
        %v490 = vsub.s32 1, %v489
        %v491 = vrot.slane %v482, %v490
        %v510 = vunpack.c.l.b16 %v466
        %v511 = vunpack.c.h.b16 %v466
        %v512 = vunpack.c.l.b16 %v467
        %v513 = vunpack.c.h.b16 %v467
        %v514 = vunpack.c.l.b16 %v468
        %v515 = vunpack.c.h.b16 %v468
        %v516 = vunpack.c.l.b16 %v469
        %v517 = vunpack.c.h.b16 %v469
        %v518 = vunpack.c.l.b16 %v470
        %v519 = vunpack.c.h.b16 %v470
        %v520 = vunpack.c.l.b16 %v471
        %v521 = vunpack.c.h.b16 %v471
        %v522 = vunpack.c.l.b16 %v472
        %v523 = vunpack.c.h.b16 %v472
        %v524 = vunpack.c.l.b16 %v473
        %v525 = vunpack.c.h.b16 %v473
        %v526 = vunpack.c.l.b16 %v474
        %v527 = vunpack.c.h.b16 %v474
        %v528 = vunpack.c.l.b16 %v475
        %v529 = vunpack.c.h.b16 %v475
        %v530 = vunpack.c.l.b16 %v476
        %v531 = vunpack.c.h.b16 %v476
        %v532 = vunpack.c.l.b16 %v477
        %v533 = vunpack.c.h.b16 %v477
        %v534 = vunpack.c.l.b16 %v478
        %v535 = vunpack.c.h.b16 %v478
        %v536 = vunpack.c.l.b16 %v479
        %v537 = vunpack.c.h.b16 %v479
        %v538 = vunpack.c.l.b16 %v480
        %v539 = vunpack.c.h.b16 %v480
        %v540 = vunpack.c.l.b16 %v481
        %v541 = vunpack.c.h.b16 %v481
        %v542 = vpack.c.b16 %v512, %v510
        %v543 = vpack.c.b16 %v513, %v511
        %v544 = vpack.c.b16 %v516, %v514
        %v545 = vpack.c.b16 %v517, %v515
        %v546 = vpack.c.b16 %v520, %v518
        %v547 = vpack.c.b16 %v521, %v519
        %v548 = vpack.c.b16 %v524, %v522
        %v549 = vpack.c.b16 %v525, %v523
        %v550 = vpack.c.b16 %v528, %v526
        %v551 = vpack.c.b16 %v529, %v527
        %v552 = vpack.c.b16 %v532, %v530
        %v553 = vpack.c.b16 %v533, %v531
        %v554 = vpack.c.b16 %v536, %v534
        %v555 = vpack.c.b16 %v537, %v535
        %v556 = vpack.c.b16 %v540, %v538
        %v557 = vpack.c.b16 %v541, %v539
        %574 = vmatprep.subr.bf16.mxu0 %v557
        %575 = vmatpush1.bf16.msra.mxu0 %v556
        %576 = vmatprep.subr.bf16.mxu0 %v555
        %577 = vmatpush1.bf16.msra.mxu0 %v554
        %578 = vmatprep.subr.bf16.mxu0 %v553
        %579 = vmatpush1.bf16.msra.mxu0 %v552
        %580 = vmatprep.subr.bf16.mxu0 %v551
        %581 = vmatpush1.bf16.msra.mxu0 %v550
        %582 = vmatprep.subr.bf16.mxu0 %v549
        %583 = vmatpush1.bf16.msra.mxu0 %v548
        %584 = vmatprep.subr.bf16.mxu0 %v547
        %585 = vmatpush1.bf16.msra.mxu0 %v546
        %586 = vmatprep.subr.bf16.mxu0 %v545
        %587 = vmatpush1.bf16.msra.mxu0 %v544
        %588 = vmatprep.subr.bf16.mxu0 %v543
        %589 = vmatpush1.bf16.msra.mxu0 %v542
        %590 = vmatprep.subr.bf16.mxu0 0
        %591 = vmatpush2.bf16.msra.mxu0 0
        %592 = vmatprep.subr.bf16.mxu0 0
        %593 = vmatpush2.bf16.msra.mxu0 0
        %594 = vmatprep.subr.bf16.mxu0 0
        %595 = vmatpush2.bf16.msra.mxu0 0
        %596 = vmatprep.subr.bf16.mxu0 0
        %597 = vmatpush2.bf16.msra.mxu0 0
        %598 = vmatprep.subr.bf16.mxu0 0
        %599 = vmatpush2.bf16.msra.mxu0 0
        %600 = vmatprep.subr.bf16.mxu0 0
        %601 = vmatpush2.bf16.msra.mxu0 0
        %602 = vmatprep.subr.bf16.mxu0 0
        %603 = vmatpush2.bf16.msra.mxu0 0
        %604 = vmatprep.subr.bf16.mxu0 0
        %605 = vmatpush2.bf16.msra.mxu0 0
        %606 = vmatprep.mubr.bf16.mxu0 0
        %607 = vmatmul.mubr.bf16.gmra.mxu0 %v465
        %v608 = vpop.f32.mrf.mxu0
        %v609 = vadd.f32 %v487, %v608
        %v610 = vpop.f32.mrf.mxu0
        %v611 = vadd.f32 %v491, %v610
        %v612 = vpop.f32.mrf.mxu0
        %v613 = vpop.f32.mrf.mxu0
        %614 = vdwg.mxu0
        %v615 = vld [vmem:[#allocation13] sm:$0xf]
        %v616 = vld [vmem:[#allocation13 + $0x4] sm:$0xf]
        %v617 = vld [vmem:[#allocation13 + $0x8] sm:$0xf]
        %v618 = vld [vmem:[#allocation13 + $0xc] sm:$0xf]
        %v619 = vld [vmem:[#allocation13 + $0x10] sm:$0xf]
        %v620 = vld [vmem:[#allocation13 + $0x14] sm:$0xf]
        %v621 = vld [vmem:[#allocation13 + $0x18] sm:$0xf]
        %v622 = vld [vmem:[#allocation13 + $0x1c] sm:$0xf]
        %v623 = vld [vmem:[#allocation13 + $0x20] sm:$0xf]
        %v624 = vld [vmem:[#allocation13 + $0x24] sm:$0xf]
        %v625 = vld [vmem:[#allocation13 + $0x28] sm:$0xf]
        %v626 = vld [vmem:[#allocation13 + $0x2c] sm:$0xf]
        %v627 = vld [vmem:[#allocation13 + $0x30] sm:$0xf]
        %v628 = vld [vmem:[#allocation13 + $0x34] sm:$0xf]
        %v629 = vld [vmem:[#allocation13 + $0x38] sm:$0xf]
        %v630 = vld [vmem:[#allocation13 + $0x3c] sm:$0xf]
        %v631 = vld [vmem:[%s6] sm:$0x1]
        %v633 = vlaneseq
        %v634 = vshrl.u32 %v633, 7
        %v635 = vsub.s32 0, %v634
        %v636 = vrot.slane %v631, %v635
        %v654 = vunpack.c.l.b16 %v615
        %v655 = vunpack.c.l.b16 %v616
        %v656 = vunpack.c.l.b16 %v617
        %v657 = vunpack.c.l.b16 %v618
        %v658 = vunpack.c.l.b16 %v619
        %v659 = vunpack.c.l.b16 %v620
        %v660 = vunpack.c.l.b16 %v621
        %v661 = vunpack.c.l.b16 %v622
        %v662 = vunpack.c.l.b16 %v623
        %v663 = vunpack.c.l.b16 %v624
        %v664 = vunpack.c.l.b16 %v625
        %v665 = vunpack.c.l.b16 %v626
        %v666 = vunpack.c.l.b16 %v627
        %v667 = vunpack.c.l.b16 %v628
        %v668 = vunpack.c.l.b16 %v629
        %v669 = vunpack.c.l.b16 %v630
        %v670 = vpack.c.b16 %v655, %v654
        %v671 = vpack.c.b16 %v657, %v656
        %v672 = vpack.c.b16 %v659, %v658
        %v673 = vpack.c.b16 %v661, %v660
        %v674 = vpack.c.b16 %v663, %v662
        %v675 = vpack.c.b16 %v665, %v664
        %v676 = vpack.c.b16 %v667, %v666
        %v677 = vpack.c.b16 %v669, %v668
        %686 = vmatprep.subr.bf16.mxu0 0
        %687 = vmatpush1.bf16.msra.mxu0 %v677
        %688 = vmatprep.subr.bf16.mxu0 0
        %689 = vmatpush1.bf16.msra.mxu0 %v676
        %690 = vmatprep.subr.bf16.mxu0 0
        %691 = vmatpush1.bf16.msra.mxu0 %v675
        %692 = vmatprep.subr.bf16.mxu0 0
        %693 = vmatpush1.bf16.msra.mxu0 %v674
        %694 = vmatprep.subr.bf16.mxu0 0
        %695 = vmatpush1.bf16.msra.mxu0 %v673
        %696 = vmatprep.subr.bf16.mxu0 0
        %697 = vmatpush1.bf16.msra.mxu0 %v672
        %698 = vmatprep.subr.bf16.mxu0 0
        %699 = vmatpush1.bf16.msra.mxu0 %v671
        %700 = vmatprep.subr.bf16.mxu0 0
        %701 = vmatpush1.bf16.msra.mxu0 %v670
        %702 = vmatprep.subr.bf16.mxu0 0
        %703 = vmatpush2.bf16.msra.mxu0 0
        %704 = vmatprep.subr.bf16.mxu0 0
        %705 = vmatpush2.bf16.msra.mxu0 0
        %706 = vmatprep.subr.bf16.mxu0 0
        %707 = vmatpush2.bf16.msra.mxu0 0
        %708 = vmatprep.subr.bf16.mxu0 0
        %709 = vmatpush2.bf16.msra.mxu0 0
        %710 = vmatprep.subr.bf16.mxu0 0
        %711 = vmatpush2.bf16.msra.mxu0 0
        %712 = vmatprep.subr.bf16.mxu0 0
        %713 = vmatpush2.bf16.msra.mxu0 0
        %714 = vmatprep.subr.bf16.mxu0 0
        %715 = vmatpush2.bf16.msra.mxu0 0
        %716 = vmatprep.subr.bf16.mxu0 0
        %717 = vmatpush2.bf16.msra.mxu0 0
        %718 = vmatprep.mubr.bf16.mxu0 0
        %719 = vmatmul.mubr.bf16.gmra.mxu0 %v465
        %v720 = vpop.f32.mrf.mxu0
        %v721 = vadd.f32 %v636, %v720
        %v722 = vpop.f32.mrf.mxu0
        %v723 = vpop.f32.mrf.mxu0
        %v724 = vpop.f32.mrf.mxu0
        %725 = vdwg.mxu0
        %vm726 = vcmask 1043456
        %v727 = vsel %vm726, %v721, 0.0
        %728 = vadd.xlane.f32.xlu0 %v727
        %v729 = vpop.xlane.xlu0 %728
        %v730 = vxor.u32 %v729, 2147483648
        %v731 = vmul.f32 %v730, 1.442695
        %v732 = vpow.pop %v731
        %v733 = vadd.f32 %v732, 1.0
        %v734 = vrcp.pop %v733
        %v735 = vmul.f32 1.0, %v734
        %v736 = vld [vmem:[%s399] sm:$0x3]
        %v737 = vld [vmem:[%s408] sm:$0xf]
        %v738 = vld [vmem:[%s408 + $0x4] sm:$0xf]
        %v739 = vld [vmem:[%s408 + $0x8] sm:$0xf]
        %v740 = vld [vmem:[%s408 + $0xc] sm:$0xf]
        %v741 = vld [vmem:[%s408 + $0x10] sm:$0xf]
        %v742 = vld [vmem:[%s408 + $0x14] sm:$0xf]
        %v743 = vld [vmem:[%s408 + $0x18] sm:$0xf]
        %v744 = vld [vmem:[%s408 + $0x1c] sm:$0xf]
        %v745 = vld [vmem:[%s408 + $0x20] sm:$0xf]
        %v746 = vld [vmem:[%s408 + $0x24] sm:$0xf]
        %v747 = vld [vmem:[%s408 + $0x28] sm:$0xf]
        %v748 = vld [vmem:[%s408 + $0x2c] sm:$0xf]
        %v749 = vld [vmem:[%s408 + $0x30] sm:$0xf]
        %v750 = vld [vmem:[%s408 + $0x34] sm:$0xf]
        %v751 = vld [vmem:[%s408 + $0x38] sm:$0xf]
        %v752 = vld [vmem:[%s408 + $0x3c] sm:$0xf]
        %v769 = vunpack.c.l.b16 %v737
        %v770 = vunpack.c.l.b16 %v738
        %v771 = vunpack.c.l.b16 %v739
        %v772 = vunpack.c.l.b16 %v740
        %v773 = vunpack.c.l.b16 %v741
        %v774 = vunpack.c.l.b16 %v742
        %v775 = vunpack.c.l.b16 %v743
        %v776 = vunpack.c.l.b16 %v744
        %v777 = vunpack.c.l.b16 %v745
        %v778 = vunpack.c.l.b16 %v746
        %v779 = vunpack.c.l.b16 %v747
        %v780 = vunpack.c.l.b16 %v748
        %v781 = vunpack.c.l.b16 %v749
        %v782 = vunpack.c.l.b16 %v750
        %v783 = vunpack.c.l.b16 %v751
        %v784 = vunpack.c.l.b16 %v752
        %v785 = vpack.c.b16 %v770, %v769
        %v786 = vpack.c.b16 %v772, %v771
        %v787 = vpack.c.b16 %v774, %v773
        %v788 = vpack.c.b16 %v776, %v775
        %v789 = vpack.c.b16 %v778, %v777
        %v790 = vpack.c.b16 %v780, %v779
        %v791 = vpack.c.b16 %v782, %v781
        %v792 = vpack.c.b16 %v784, %v783
        %801 = vmatprep.subr.bf16.mxu0 0
        %802 = vmatpush1.bf16.msra.mxu0 %v792
        %803 = vmatprep.subr.bf16.mxu0 0
        %804 = vmatpush1.bf16.msra.mxu0 %v791
        %805 = vmatprep.subr.bf16.mxu0 0
        %806 = vmatpush1.bf16.msra.mxu0 %v790
        %807 = vmatprep.subr.bf16.mxu0 0
        %808 = vmatpush1.bf16.msra.mxu0 %v789
        %809 = vmatprep.subr.bf16.mxu0 0
        %810 = vmatpush1.bf16.msra.mxu0 %v788
        %811 = vmatprep.subr.bf16.mxu0 0
        %812 = vmatpush1.bf16.msra.mxu0 %v787
        %813 = vmatprep.subr.bf16.mxu0 0
        %814 = vmatpush1.bf16.msra.mxu0 %v786
        %815 = vmatprep.subr.bf16.mxu0 0
        %816 = vmatpush1.bf16.msra.mxu0 %v785
        %817 = vmatprep.subr.bf16.mxu0 0
        %818 = vmatpush2.bf16.msra.mxu0 0
        %819 = vmatprep.subr.bf16.mxu0 0
        %820 = vmatpush2.bf16.msra.mxu0 0
        %821 = vmatprep.subr.bf16.mxu0 0
        %822 = vmatpush2.bf16.msra.mxu0 0
        %823 = vmatprep.subr.bf16.mxu0 0
        %824 = vmatpush2.bf16.msra.mxu0 0
        %825 = vmatprep.subr.bf16.mxu0 0
        %826 = vmatpush2.bf16.msra.mxu0 0
        %827 = vmatprep.subr.bf16.mxu0 0
        %828 = vmatpush2.bf16.msra.mxu0 0
        %829 = vmatprep.subr.bf16.mxu0 0
        %830 = vmatpush2.bf16.msra.mxu0 0
        %831 = vmatprep.subr.bf16.mxu0 0
        %832 = vmatpush2.bf16.msra.mxu0 0
        %833 = vmatprep.mubr.bf16.mxu0 0
        %834 = vmatmul.mubr.bf16.gmra.mxu0 %v736
        %v835 = vpop.f32.mrf.mxu0
        %v836 = vadd.f32 0.0, %v835
        %v837 = vpop.f32.mrf.mxu0
        %v838 = vpop.f32.mrf.mxu0
        %v839 = vpop.f32.mrf.mxu0
        %840 = vdwg.mxu0
        %v841 = vmul.f32 %v735, %v836
        %842 = vst [vmem:[%s463] sm:$0xf] %v841
        %v843 = vsel %vm726, %v609, -inf
        %v844 = vsel %vm726, %v611, -inf
        %v845 = vmax.f32 %v843, %v844
        %846 = vmax.xlane.f32.xlu0 %v845
        %v847 = vpop.xlane.xlu0 %846
        %v848 = vsub.f32 %v609, %v847
        %v849 = vsub.f32 %v611, %v847
        %v850 = vmul.f32 %v848, 1.442695
        %v851 = vpow.pop %v850
        %v852 = vmul.f32 %v849, 1.442695
        %v853 = vpow.pop %v852
        %v854 = vsub.f32 1.0, %v735
        %v855 = vsel %vm726, %v851, 0.0
        %v856 = vsel %vm726, %v853, 0.0
        %v857 = vadd.f32 %v855, %v856
        %858 = vadd.xlane.f32.xlu0 %v857
        %v859 = vpop.xlane.xlu0 %858
        %v860 = vrcp.pop %v859
        %v861 = vmul.f32 %v854, %v860
        %v862 = vmul.f32 %v851, %v861
        %v863 = vmul.f32 %v853, %v861
        %v866 = vcombine.low %v862, %v863
        %868 = vst [vmem:[%s456] sm:$0xff] %v866
        %s869 = sand.u32 %s228, 1
        %s870 = scalar_lea.sflag [#allocation7], %s869
        %s871 = sand.u32 %s228, 1
        %s872 = smul.addr %s871, 8
        %s873 = scalar_lea.vmem [#allocation14], %s872
        %s874 = sand.u32 %s256, 1
        %s875 = scalar_lea.sflag [#allocation16], %s874
        %s876 = sand.u32 %s256, 1
        %s877 = smul.addr %s876, 4
        %s878 = scalar_lea.vmem [#allocation15], %s877
        // Predicated region
        $region69: #{tpu_custom_call.1} parent=47 // pred_check
          %p879 = pneg %p238
        $region70: #{tpu_custom_call.1} parent=47 // pred_check_branch
          %881 = sbr.rel (%p879) target = $region72
        $region71: #{tpu_custom_call.1} parent=47 // pred_region
          %s883 = ssub.s32 128, 128
          %884 = vsyncadd %s870, %s883
          %s885 = smul.addr %s39, 2
          %s886 = smul.addr %s38, 2
          %s887 = sadd.s32 %s885, %s886
          %s888 = smul.addr %s887, 64
          %s889 = scalar_lea.hbm %s7, %s888
          %s891 = sshll.u32 %s873, 4
          %s892 = int_to_ptr.vmem [resolvable:$true] %s891
          %894 = dma.vmem_to_hbm [thread:$0]  %s892, 128, %s889, %s870
        $region72: #{tpu_custom_call.1} parent=47 // pred_fallthru
          _
        // Predicated region
        $region73: #{tpu_custom_call.1} parent=47 // pred_check
          %p895 = pneg %p266
        $region74: #{tpu_custom_call.1} parent=47 // pred_check_branch
          %897 = sbr.rel (%p895) target = $region76
        $region75: #{tpu_custom_call.1} parent=47 // pred_region
          %s899 = ssub.s32 64, 64
          %900 = vsyncadd %s875, %s899
          %s901 = sadd.s32 %s39, %s38
          %s902 = smul.addr %s901, 64
          %s903 = scalar_lea.hbm %s8, %s902
          %s905 = sshll.u32 %s878, 4
          %s906 = int_to_ptr.vmem [resolvable:$true] %s905
          %908 = dma.vmem_to_hbm [thread:$0]  %s906, 64, %s903, %s875
        $region76: #{tpu_custom_call.1} parent=47 // pred_fallthru
          _
      $region48: #{tpu_custom_call.1} parent=5 // pred_fallthru
        _
      %p909 = scmp.le.s32.totalorder 2, %s28
      // Predicated region
      $region77: #{tpu_custom_call.1} parent=5 // pred_check
        %p910 = pneg %p909
      $region78: #{tpu_custom_call.1} parent=5 // pred_check_branch
        %912 = sbr.rel (%p910) target = $region80
      $region79: #{tpu_custom_call.1} parent=5 // pred_region
        %s913 = ssub.s32 %s28, 2
        // Predicated region
        $region81: #{tpu_custom_call.1} parent=79 // pred_check
          %p914 = pneg %p244
        $region82: #{tpu_custom_call.1} parent=79 // pred_check_branch
          %916 = sbr.rel (%p914) target = $region84
        $region83: #{tpu_custom_call.1} parent=79 // pred_region
          %s917 = sand.u32 %s229, 1
          %s918 = scalar_lea.sflag [#allocation7], %s917
          %s919 = sand.u32 %s229, 1
          %s920 = smul.addr %s919, 8
          %s921 = scalar_lea.vmem [#allocation14], %s920
          %922 = dma.done %s918, 128
        $region84: #{tpu_custom_call.1} parent=79 // pred_fallthru
          _
        // Predicated region
        $region85: #{tpu_custom_call.1} parent=79 // pred_check
          %p923 = pneg %p272
        $region86: #{tpu_custom_call.1} parent=79 // pred_check_branch
          %925 = sbr.rel (%p923) target = $region88
        $region87: #{tpu_custom_call.1} parent=79 // pred_region
          %s926 = sand.u32 %s257, 1
          %s927 = scalar_lea.sflag [#allocation16], %s926
          %s928 = sand.u32 %s257, 1
          %s929 = smul.addr %s928, 4
          %s930 = scalar_lea.vmem [#allocation15], %s929
          %931 = dma.done %s927, 64
        $region88: #{tpu_custom_call.1} parent=79 // pred_fallthru
          _
      $region80: #{tpu_custom_call.1} parent=5 // pred_fallthru
        _
    $region6: #{tpu_custom_call.1} parent=1 // loop_footer
      %s32 = sadd.s32 1, %s28
    $region7: #{tpu_custom_call.1} parent=1 // loop_footer_branch
      %27 = sbr.rel target = $region3
    $region8: #{tpu_custom_call.1} parent=1 // loop_exit
      _
    %932 = vsyncpa [#allocation6], 1
    %s933 = scalar_lea.sflag [#allocation6], 1
    %934 = vsyncpa %s933, 1
    %935 = vsyncpa [#allocation9], 1
    %s936 = scalar_lea.sflag [#allocation9], 1
    %937 = vsyncpa %s936, 1
    %938 = vsyncpa [#allocation12], 1
    %939 = vsyncpa [#allocation7], 1
    %s940 = scalar_lea.sflag [#allocation7], 1
    %941 = vsyncpa %s940, 1
    %942 = vsyncpa [#allocation16], 1
    %s943 = scalar_lea.sflag [#allocation16], 1
    %944 = vsyncpa %s943, 1

</llo_original>
